<compile_context>
chip_gen: v5e
topology: v5e:2x2
jax: 0.10.0
libtpu: 0.0.40
codegen_flags: <defaults>
</compile_context>

<pallas_src>
import functools

import jax
import jax.numpy as jnp
from jax.experimental import pallas as pl
from jax.experimental.pallas import tpu as pltpu


def _round_up(x, m):
    return ((x + m - 1) // m) * m


def _mhc_kernel(x_ref, wd_ref, bd_ref, wo_ref, bo_ref, out_ref, acc_ref):
    # Grid: (batch tiles i ["parallel"], dense-output chunks k ["arbitrary"]).
    # x_ref:  [TB, H]   CLS-token features (block index constant over k -> VMEM resident)
    # wd_ref: [H, tn]   k-th column chunk of the dense weight (bf16, (in,out) layout)
    # bd_ref: [1, tn]   k-th chunk of the dense bias (f32)
    # wo_ref: [tn, Lp]  matching row chunk of the stacked per-label head weights (bf16)
    # bo_ref: [1, Lp]   stacked head biases (f32, added once at the end)
    # out_ref:[TB, Lp]  logits, features dtype, lane-dense (Lp % 128 == 0)
    # acc_ref:[TB, Lp]  f32 accumulator, persists across the k axis
    k = pl.program_id(1)

    @pl.when(k == 0)
    def _():
        acc_ref[...] = jnp.zeros_like(acc_ref)

    x = x_ref[...].astype(jnp.bfloat16)
    h = jnp.dot(x, wd_ref[...], preferred_element_type=jnp.float32)   # [TB, tn]
    h = jnp.tanh(h + bd_ref[...])                                     # f32 (v5e-safe)
    acc_ref[...] += jnp.dot(h.astype(jnp.bfloat16), wo_ref[...],
                            preferred_element_type=jnp.float32)       # [TB, Lp]

    @pl.when(k == pl.num_programs(1) - 1)
    def _():
        out_ref[...] = (acc_ref[...] + bo_ref[...]).astype(out_ref.dtype)


def prepare_params(w_dense, b_dense, w_out, b_out):
    """One-time parameter packing -- call OUTSIDE the jitted forward step.

    w_dense: [H, H] (in, out) layout (PyTorch [out, in] transposed);
    w_out:   [H, L] -- the L Linear(H, 1) heads stacked column-wise.
    Converts matmul weights to bf16 (native MXU dtype, halves weight HBM
    traffic) and pads the label dim to a multiple of 128 (lane-dense store).
    """
    H = w_dense.shape[0]
    L = w_out.shape[1]
    Lp = _round_up(max(L, 1), 128)
    wd = w_dense.astype(jnp.bfloat16)                                   # [H, H]
    bd = b_dense.reshape(1, H).astype(jnp.float32)                      # [1, H]
    wo = jnp.pad(w_out.astype(jnp.bfloat16), ((0, 0), (0, Lp - L)))     # [H, Lp]
    bo = jnp.pad(b_out.astype(jnp.float32).reshape(1, L),
                 ((0, 0), (0, Lp - L)))                                 # [1, Lp]
    return wd, bd, wo, bo, L


@functools.partial(jax.jit, static_argnames=("num_labels",))
def roberta_multi_head_classification(features, wd, bd, wo, bo, *, num_labels):
    """features: [B, S, H]; (wd, bd, wo, bo) from prepare_params().
    Returns logits [B, num_labels] in features.dtype."""
    B, S, H = features.shape
    Lp = wo.shape[1]
    L = num_labels

    # --- tiling ----------------------------------------------------------
    # Batch tile: full batch up to 512 rows (multiple of 8, MXU-friendly);
    # larger batches split into >=2 tiles so both v7x TensorCores get work.
    TB = B if B <= 512 else 512
    num_b_tiles = pl.cdiv(B, TB)

    # Dense-output chunk size (reduction axis for the second matmul).
    if H % 128 != 0:
        tn = H                                   # tiny / unaligned H: one step
    else:
        tn = next(t for t in (512, 256, 128) if H % t == 0)
    num_k = H // tn

    # --- fused CLS gather --------------------------------------------------
    if H % 128 == 0:
        # Free reshape for default row-major layout: columns [0, H) of each row
        # of [B, S*H] are exactly token 0, so the x BlockSpec pulls the CLS rows
        # via a strided DMA with no [B, H] intermediate in HBM.
        x_in = features.reshape(B, S * H)
    else:
        # TODO(synk): H not lane-aligned; fall back to an XLA CLS slice.
        x_in = features[:, 0, :]

    cost = pl.CostEstimate(
        flops=2 * B * H * H + 2 * B * H * Lp,
        transcendentals=B * H,
        bytes_accessed=(B * H * features.dtype.itemsize        # CLS rows (strided)
                        + H * H * 2 + H * Lp * 2               # bf16 weights
                        + H * 4 + Lp * 4                       # f32 biases
                        + B * Lp * features.dtype.itemsize),   # padded output
    )

    out = pl.pallas_call(
        _mhc_kernel,
        out_shape=jax.ShapeDtypeStruct((B, Lp), features.dtype),
        grid_spec=pltpu.PrefetchScalarGridSpec(
            num_scalar_prefetch=0,
            grid=(num_b_tiles, num_k),
            in_specs=[
                pl.BlockSpec((TB, H), lambda i, k: (i, 0)),    # CLS rows; resident over k
                pl.BlockSpec((H, tn), lambda i, k: (0, k)),    # dense weight chunk
                pl.BlockSpec((1, tn), lambda i, k: (0, k)),    # dense bias chunk
                pl.BlockSpec((tn, Lp), lambda i, k: (k, 0)),   # head weight chunk
                pl.BlockSpec((1, Lp), lambda i, k: (0, 0)),    # head biases (resident)
            ],
            out_specs=pl.BlockSpec((TB, Lp), lambda i, k: (i, 0)),
            scratch_shapes=[pltpu.VMEM((TB, Lp), jnp.float32)],
        ),
        compiler_params=pltpu.CompilerParams(
            dimension_semantics=("parallel", "arbitrary"),
        ),
        cost_estimate=cost,
    )(x_in, wd, bd, wo, bo)

    return out[:, :L]


def _reference(features, w_dense, b_dense, w_out, b_out):
    x = features[:, 0, :]
    h = jnp.tanh(x @ w_dense + b_dense)
    return h @ w_out + b_out


if __name__ == "__main__":
    key = jax.random.PRNGKey(0)

    # Config 1 (B=4, S=8, H=128, L=4): lane-aligned hidden size -> exercises the
    # fused CLS-slice path. Config 2 (B=2, S=8, H=32, L=4): tiny, fallback path.
    for (B, S, H, L) in [(4, 8, 128, 4), (2, 8, 32, 4)]:
        key, k_feat, k_wd, k_bd, k_wo, k_bo = jax.random.split(key, 6)

        features = jax.random.normal(k_feat, (B, S, H), dtype=jnp.float32)
        # Deterministic synthetic parameters; weights kept in [in, out] layout
        # (PyTorch [out, in] transposed); the L Linear(H,1) heads stacked into
        # a single [H, L] matrix.
        w_dense = jax.random.normal(k_wd, (H, H), dtype=jnp.float32) * 0.02
        b_dense = jax.random.normal(k_bd, (H,), dtype=jnp.float32) * 0.02
        w_out = jax.random.normal(k_wo, (H, L), dtype=jnp.float32) * 0.02
        b_out = jax.random.normal(k_bo, (L,), dtype=jnp.float32) * 0.02

        # One-time packing (in real use: done once outside the jitted step).
        wd, bd, wo, bo, num_labels = prepare_params(w_dense, b_dense, w_out, b_out)

        out = jax.block_until_ready(
            roberta_multi_head_classification(features, wd, bd, wo, bo,
                                              num_labels=num_labels))
        ref = _reference(features, w_dense, b_dense, w_out, b_out)

        assert out.shape == (B, L), out.shape
        # bf16 matmul inputs with f32 accumulation => slightly loose tolerance
        # vs. the all-f32 reference.
        assert jnp.allclose(out, ref, atol=1e-2, rtol=5e-2), (
            "mismatch vs reference, max abs diff = "
            f"{float(jnp.max(jnp.abs(out - ref)))}")

    print("KERNEL_OK")
</pallas_src>

<mosaic_0001>
module attributes {stable_mosaic.version = 11 : i64} {
  func.func @_mhc_kernel(%arg0: i32, %arg1: i32, %arg2: memref<4x128xf32, #tpu.memory_space<vmem>>, %arg3: memref<128x128xbf16, #tpu.memory_space<vmem>>, %arg4: memref<1x128xf32, #tpu.memory_space<vmem>>, %arg5: memref<128x128xbf16, #tpu.memory_space<vmem>>, %arg6: memref<1x128xf32, #tpu.memory_space<vmem>>, %arg7: memref<4x128xf32, #tpu.memory_space<vmem>>, %arg8: memref<4x128xf32, #tpu.memory_space<vmem>>) attributes {dimension_semantics = [#tpu.dimension_semantics<parallel>, #tpu.dimension_semantics<arbitrary>], iteration_bounds = array<i64: 1, 1>, scalar_prefetch = 0 : i64, scratch_operands = 1 : i64, tpu.core_type = #tpu.core_type<tc>, window_params = [{transform_indices = @transform_0, window_bounds = array<i64: 4, 128>}, {transform_indices = @transform_1, window_bounds = array<i64: 128, 128>}, {transform_indices = @transform_2, window_bounds = array<i64: 1, 128>}, {transform_indices = @transform_3, window_bounds = array<i64: 128, 128>}, {pipeline_mode = #tpu.pipeline_mode<synchronous>, transform_indices = @transform_4, window_bounds = array<i64: 1, 128>}, {transform_indices = @transform_5, window_bounds = array<i64: 4, 128>}]} {
    %c0_i32 = arith.constant 0 : i32
    %0 = arith.cmpi eq, %arg1, %c0_i32 : i32
    %1 = arith.extui %0 : i1 to i32
    %c0_i32_0 = arith.constant 0 : i32
    %2 = arith.cmpi ne, %1, %c0_i32_0 : i32
    scf.if %2 {
      %cst_15 = arith.constant 0.000000e+00 : f32
      %20 = vector.broadcast %cst_15 : f32 to vector<4x128xf32>
      %c0_16 = arith.constant 0 : index
      %c0_17 = arith.constant 0 : index
      %21 = vector.load %arg8[%c0_16, %c0_17] : memref<4x128xf32, #tpu.memory_space<vmem>>, vector<4x128xf32>
      tpu.vector_store %arg8[%c0_16, %c0_17], %20 {strides = array<i32>} : memref<4x128xf32, #tpu.memory_space<vmem>>, vector<4x128xf32>,
    } else {
    }
    %c0 = arith.constant 0 : index
    %c0_1 = arith.constant 0 : index
    %3 = vector.load %arg2[%c0, %c0_1] : memref<4x128xf32, #tpu.memory_space<vmem>>, vector<4x128xf32>
    %4 = arith.truncf %3 : vector<4x128xf32> to vector<4x128xbf16>
    %c0_2 = arith.constant 0 : index
    %c0_3 = arith.constant 0 : index
    %5 = vector.load %arg3[%c0_2, %c0_3] : memref<128x128xbf16, #tpu.memory_space<vmem>>, vector<128x128xbf16>
    %cst = arith.constant dense<0.000000e+00> : vector<4x128xf32>
    %6 = tpu.matmul %4, %5, %cst {dimension_numbers = #tpu.dot_dimension_numbers<[1], [0], [0], [1], [0, 0, 1, 1], [], []>} : vector<4x128xbf16>, vector<128x128xbf16>, vector<4x128xf32> -> vector<4x128xf32>
    %c0_4 = arith.constant 0 : index
    %c0_5 = arith.constant 0 : index
    %7 = vector.load %arg4[%c0_4, %c0_5] : memref<1x128xf32, #tpu.memory_space<vmem>>, vector<1x128xf32>
    %8 = vector.broadcast %7 : vector<1x128xf32> to vector<4x128xf32>
    %9 = arith.addf %6, %8 : vector<4x128xf32>
    %10 = math.tanh %9 : vector<4x128xf32>
    %c0_6 = arith.constant 0 : index
    %c0_7 = arith.constant 0 : index
    %11 = vector.load %arg8[%c0_6, %c0_7] : memref<4x128xf32, #tpu.memory_space<vmem>>, vector<4x128xf32>
    %12 = arith.truncf %10 : vector<4x128xf32> to vector<4x128xbf16>
    %c0_8 = arith.constant 0 : index
    %c0_9 = arith.constant 0 : index
    %13 = vector.load %arg5[%c0_8, %c0_9] : memref<128x128xbf16, #tpu.memory_space<vmem>>, vector<128x128xbf16>
    %cst_10 = arith.constant dense<0.000000e+00> : vector<4x128xf32>
    %14 = tpu.matmul %12, %13, %cst_10 {dimension_numbers = #tpu.dot_dimension_numbers<[1], [0], [0], [1], [0, 0, 1, 1], [], []>} : vector<4x128xbf16>, vector<128x128xbf16>, vector<4x128xf32> -> vector<4x128xf32>
    %15 = arith.addf %11, %14 : vector<4x128xf32>
    %c0_11 = arith.constant 0 : index
    %c0_12 = arith.constant 0 : index
    %16 = vector.load %arg8[%c0_11, %c0_12] : memref<4x128xf32, #tpu.memory_space<vmem>>, vector<4x128xf32>
    tpu.vector_store %arg8[%c0_11, %c0_12], %15 {strides = array<i32>} : memref<4x128xf32, #tpu.memory_space<vmem>>, vector<4x128xf32>,
    %c0_i32_13 = arith.constant 0 : i32
    %17 = arith.cmpi eq, %arg1, %c0_i32_13 : i32
    %18 = arith.extui %17 : i1 to i32
    %c0_i32_14 = arith.constant 0 : i32
    %19 = arith.cmpi ne, %18, %c0_i32_14 : i32
    scf.if %19 {
      %c0_15 = arith.constant 0 : index
      %c0_16 = arith.constant 0 : index
      %20 = vector.load %arg8[%c0_15, %c0_16] : memref<4x128xf32, #tpu.memory_space<vmem>>, vector<4x128xf32>
      %c0_17 = arith.constant 0 : index
      %c0_18 = arith.constant 0 : index
      %21 = vector.load %arg6[%c0_17, %c0_18] : memref<1x128xf32, #tpu.memory_space<vmem>>, vector<1x128xf32>
      %22 = vector.broadcast %21 : vector<1x128xf32> to vector<4x128xf32>
      %23 = arith.addf %20, %22 : vector<4x128xf32>
      %c0_19 = arith.constant 0 : index
      %c0_20 = arith.constant 0 : index
      %24 = vector.load %arg7[%c0_19, %c0_20] : memref<4x128xf32, #tpu.memory_space<vmem>>, vector<4x128xf32>
      tpu.vector_store %arg7[%c0_19, %c0_20], %23 {strides = array<i32>} : memref<4x128xf32, #tpu.memory_space<vmem>>, vector<4x128xf32>,
    } else {
    }
    return
  }
  func.func @transform_0(%arg0: i32, %arg1: i32) -> (i32, i32) {
    %c0_i32 = arith.constant 0 : i32
    %c0_i32_0 = arith.constant 0 : i32
    return %arg0, %c0_i32 : i32, i32
  }
  func.func @transform_1(%arg0: i32, %arg1: i32) -> (i32, i32) {
    %c0_i32 = arith.constant 0 : i32
    %c0_i32_0 = arith.constant 0 : i32
    return %c0_i32, %arg1 : i32, i32
  }
  func.func @transform_2(%arg0: i32, %arg1: i32) -> (i32, i32) {
    %c0_i32 = arith.constant 0 : i32
    %c0_i32_0 = arith.constant 0 : i32
    return %c0_i32, %arg1 : i32, i32
  }
  func.func @transform_3(%arg0: i32, %arg1: i32) -> (i32, i32) {
    %c0_i32 = arith.constant 0 : i32
    %c0_i32_0 = arith.constant 0 : i32
    return %arg1, %c0_i32 : i32, i32
  }
  func.func @transform_4(%arg0: i32, %arg1: i32) -> (i32, i32) {
    %c0_i32 = arith.constant 0 : i32
    %c0_i32_0 = arith.constant 0 : i32
    %c0_i32_1 = arith.constant 0 : i32
    return %c0_i32, %c0_i32_0 : i32, i32
  }
  func.func @transform_5(%arg0: i32, %arg1: i32) -> (i32, i32) {
    %c0_i32 = arith.constant 0 : i32
    %c0_i32_0 = arith.constant 0 : i32
    return %arg0, %c0_i32 : i32, i32
  }
}

</mosaic_0001>

<llo_original>
// kernel: roberta_multi_head_classification.1
$region0: #{roberta_multi_head_classification.1}
  #allocation0 [shape = 'u32[]', space=smem, size = 0x4, offset = 0x4, fixed_abs, tag = 'smem constant byte address 0x4 - core index']
  #allocation1 [shape = 'u32[72,128]{1,0:T(1,128)}', space=vmem, size = 0x9000, scoped, tag = 'internal scratch']
  #allocation2 [shape = 'f32[4,128]{1,0:T(4,128)}', space=vmem, size = 0x800, scoped, tag = 'scratch operand']
  %s0 = inlined_call_operand.vmem [shape: f32[4,1024], index: 0, kind: input, shape index: {}]
  %s1 = inlined_call_operand.vmem [shape: bf16[128,128], index: 1, kind: input, shape index: {}]
  %s2 = inlined_call_operand.vmem [shape: f32[1,128], index: 2, kind: input, shape index: {}]
  %s3 = inlined_call_operand.hbm [shape: bf16[128,128], index: 3, kind: input, shape index: {}]
  %s4 = inlined_call_operand.vmem [shape: f32[1,128], index: 4, kind: input, shape index: {}]
  %s5 = inlined_call_operand.hbm [shape: f32[4,128], index: 5, kind: output, shape index: {}]
  %s6 = sld [smem:[#allocation0]]
  $region42: #{roberta_multi_head_classification.1} parent=0
    _
  %s8 = ssub.s32 1, %s6
  %s9 = scalar_select 0, %s8, %s6
  $region1: #{roberta_multi_head_classification.1} parent=0
    #allocation3 [shape = 'u8[32768]{0}', space=vmem, size = 0x8000, scoped, tag = 'input window, operand 3, single buffered']
    #allocation4 [shape = 's32[1]{0}', space=sflag, size = 0x4, scoped, tag = 'scoped memory for roberta_multi_head_classification.1']
    #allocation5 [shape = 's32[1]{0}', space=sflag, size = 0x4, scoped, tag = 'scoped memory for roberta_multi_head_classification.1']
    #allocation6 [shape = 'u8[2048]{0}', space=vmem, size = 0x800, scoped, tag = 'output window, operand 0, single buffered']
    %10 = vsyncpa [#allocation4], 0
    %11 = vsyncpa [#allocation5], 0
    // Predicated region
    $region2: #{roberta_multi_head_classification.1} parent=1 // pred_check
      _
    $region3: #{roberta_multi_head_classification.1} parent=1 // pred_check_branch
      %13 = sbr.rel (0) target = $region5
    $region4: #{roberta_multi_head_classification.1} parent=1 // pred_region
      _
    $region5: #{roberta_multi_head_classification.1} parent=1 // pred_fallthru
      _
    // Predicated region
    $region6: #{roberta_multi_head_classification.1} parent=1 // pred_check
      _
    $region7: #{roberta_multi_head_classification.1} parent=1 // pred_check_branch
      %15 = sbr.rel (0) target = $region9
    $region8: #{roberta_multi_head_classification.1} parent=1 // pred_region
      _
    $region9: #{roberta_multi_head_classification.1} parent=1 // pred_fallthru
      _
    // Predicated region
    $region10: #{roberta_multi_head_classification.1} parent=1 // pred_check
      _
    $region11: #{roberta_multi_head_classification.1} parent=1 // pred_check_branch
      %17 = sbr.rel (0) target = $region13
    $region12: #{roberta_multi_head_classification.1} parent=1 // pred_region
      _
    $region13: #{roberta_multi_head_classification.1} parent=1 // pred_fallthru
      _
    // Predicated region
    $region14: #{roberta_multi_head_classification.1} parent=1 // pred_check
      _
    $region15: #{roberta_multi_head_classification.1} parent=1 // pred_check_branch
      %19 = sbr.rel (0) target = $region17
    $region16: #{roberta_multi_head_classification.1} parent=1 // pred_region
      %21 = vsyncadd [#allocation4], 0
      %s22 = sshll.u32 %s3, 4
      %s23 = int_to_ptr.hbm [resolvable:$true] %s22
      %s24 = sshll.u32 [#allocation3], 4
      %s25 = int_to_ptr.vmem [resolvable:$true] %s24
      %30 = dma.hbm_to_vmem [thread:$0]  %s23, 1024, %s25, [#allocation4], 64, 64, 4
    $region17: #{roberta_multi_head_classification.1} parent=1 // pred_fallthru
      _
    // Predicated region
    $region18: #{roberta_multi_head_classification.1} parent=1 // pred_check
      _
    $region19: #{roberta_multi_head_classification.1} parent=1 // pred_check_branch
      %32 = sbr.rel (0) target = $region21
    $region20: #{roberta_multi_head_classification.1} parent=1 // pred_region
      _
    $region21: #{roberta_multi_head_classification.1} parent=1 // pred_fallthru
      _
    // Predicated region
    $region22: #{roberta_multi_head_classification.1} parent=1 // pred_check
      _
    $region23: #{roberta_multi_head_classification.1} parent=1 // pred_check_branch
      %34 = sbr.rel (0) target = $region25
    $region24: #{roberta_multi_head_classification.1} parent=1 // pred_region
      %36 = dma.done [#allocation4], 1024
    $region25: #{roberta_multi_head_classification.1} parent=1 // pred_fallthru
      _
    %p37 = scmp.eq.s32.totalorder 0, 0
    // Predicated region
    $region26: #{roberta_multi_head_classification.1} parent=1 // pred_check
      %p38 = pneg %p37
    $region27: #{roberta_multi_head_classification.1} parent=1 // pred_check_branch
      %40 = sbr.rel (%p38) target = $region29
    $region28: #{roberta_multi_head_classification.1} parent=1 // pred_region
      %41 = vst [vmem:[#allocation2] sm:$0xf] 0.0
    $region29: #{roberta_multi_head_classification.1} parent=1 // pred_fallthru
      _
    %v42 = vld [vmem:[%s0] sm:$0xf]
    %v43 = vpack.c.bf16 %v42, %v42
    %v44 = vld [vmem:[%s1] sm:$0xf]
    %v45 = vld [vmem:[%s1 + $0x4] sm:$0xf]
    %v46 = vld [vmem:[%s1 + $0x8] sm:$0xf]
    %v47 = vld [vmem:[%s1 + $0xc] sm:$0xf]
    %v48 = vld [vmem:[%s1 + $0x10] sm:$0xf]
    %v49 = vld [vmem:[%s1 + $0x14] sm:$0xf]
    %v50 = vld [vmem:[%s1 + $0x18] sm:$0xf]
    %v51 = vld [vmem:[%s1 + $0x1c] sm:$0xf]
    %v52 = vld [vmem:[%s1 + $0x20] sm:$0xf]
    %v53 = vld [vmem:[%s1 + $0x24] sm:$0xf]
    %v54 = vld [vmem:[%s1 + $0x28] sm:$0xf]
    %v55 = vld [vmem:[%s1 + $0x2c] sm:$0xf]
    %v56 = vld [vmem:[%s1 + $0x30] sm:$0xf]
    %v57 = vld [vmem:[%s1 + $0x34] sm:$0xf]
    %v58 = vld [vmem:[%s1 + $0x38] sm:$0xf]
    %v59 = vld [vmem:[%s1 + $0x3c] sm:$0xf]
    %v60 = vld [vmem:[%s2] sm:$0x1]
    %v62 = vperm.slane %v60, 0
    %v80 = vunpack.c.l.b16 %v44
    %v81 = vunpack.c.l.b16 %v45
    %v82 = vunpack.c.l.b16 %v46
    %v83 = vunpack.c.l.b16 %v47
    %v84 = vunpack.c.l.b16 %v48
    %v85 = vunpack.c.l.b16 %v49
    %v86 = vunpack.c.l.b16 %v50
    %v87 = vunpack.c.l.b16 %v51
    %v88 = vunpack.c.l.b16 %v52
    %v89 = vunpack.c.l.b16 %v53
    %v90 = vunpack.c.l.b16 %v54
    %v91 = vunpack.c.l.b16 %v55
    %v92 = vunpack.c.l.b16 %v56
    %v93 = vunpack.c.l.b16 %v57
    %v94 = vunpack.c.l.b16 %v58
    %v95 = vunpack.c.l.b16 %v59
    %v96 = vpack.c.b16 %v81, %v80
    %v97 = vpack.c.b16 %v83, %v82
    %v98 = vpack.c.b16 %v85, %v84
    %v99 = vpack.c.b16 %v87, %v86
    %v100 = vpack.c.b16 %v89, %v88
    %v101 = vpack.c.b16 %v91, %v90
    %v102 = vpack.c.b16 %v93, %v92
    %v103 = vpack.c.b16 %v95, %v94
    %112 = vmatpush.bf16.msra.mxu0 %v103
    %113 = vmatpush.bf16.msra.mxu0 %v102
    %114 = vmatpush.bf16.msra.mxu0 %v101
    %115 = vmatpush.bf16.msra.mxu0 %v100
    %116 = vmatpush.bf16.msra.mxu0 %v99
    %117 = vmatpush.bf16.msra.mxu0 %v98
    %118 = vmatpush.bf16.msra.mxu0 %v97
    %119 = vmatpush.bf16.msra.mxu0 %v96
    %120 = vmatmul.bf16.gmra.mxu0 %v43
    %v121 = vpop.f32.mrf.mxu0
    %v122 = vadd.f32 %v62, %v121
    %v123 = vpop.f32.mrf.mxu0
    %124 = vdwg.mxu0
    %v125 = vtanh.pop %v122
    %v126 = vld [vmem:[#allocation2] sm:$0xf]
    %v127 = vpack.c.bf16 %v125, %v125
    %v128 = vld [vmem:[#allocation3] sm:$0xf]
    %v129 = vld [vmem:[#allocation3 + $0x4] sm:$0xf]
    %v130 = vld [vmem:[#allocation3 + $0x8] sm:$0xf]
    %v131 = vld [vmem:[#allocation3 + $0xc] sm:$0xf]
    %v132 = vld [vmem:[#allocation3 + $0x10] sm:$0xf]
    %v133 = vld [vmem:[#allocation3 + $0x14] sm:$0xf]
    %v134 = vld [vmem:[#allocation3 + $0x18] sm:$0xf]
    %v135 = vld [vmem:[#allocation3 + $0x1c] sm:$0xf]
    %v136 = vld [vmem:[#allocation3 + $0x20] sm:$0xf]
    %v137 = vld [vmem:[#allocation3 + $0x24] sm:$0xf]
    %v138 = vld [vmem:[#allocation3 + $0x28] sm:$0xf]
    %v139 = vld [vmem:[#allocation3 + $0x2c] sm:$0xf]
    %v140 = vld [vmem:[#allocation3 + $0x30] sm:$0xf]
    %v141 = vld [vmem:[#allocation3 + $0x34] sm:$0xf]
    %v142 = vld [vmem:[#allocation3 + $0x38] sm:$0xf]
    %v143 = vld [vmem:[#allocation3 + $0x3c] sm:$0xf]
    %v160 = vunpack.c.l.b16 %v128
    %v161 = vunpack.c.l.b16 %v129
    %v162 = vunpack.c.l.b16 %v130
    %v163 = vunpack.c.l.b16 %v131
    %v164 = vunpack.c.l.b16 %v132
    %v165 = vunpack.c.l.b16 %v133
    %v166 = vunpack.c.l.b16 %v134
    %v167 = vunpack.c.l.b16 %v135
    %v168 = vunpack.c.l.b16 %v136
    %v169 = vunpack.c.l.b16 %v137
    %v170 = vunpack.c.l.b16 %v138
    %v171 = vunpack.c.l.b16 %v139
    %v172 = vunpack.c.l.b16 %v140
    %v173 = vunpack.c.l.b16 %v141
    %v174 = vunpack.c.l.b16 %v142
    %v175 = vunpack.c.l.b16 %v143
    %v176 = vpack.c.b16 %v161, %v160
    %v177 = vpack.c.b16 %v163, %v162
    %v178 = vpack.c.b16 %v165, %v164
    %v179 = vpack.c.b16 %v167, %v166
    %v180 = vpack.c.b16 %v169, %v168
    %v181 = vpack.c.b16 %v171, %v170
    %v182 = vpack.c.b16 %v173, %v172
    %v183 = vpack.c.b16 %v175, %v174
    %192 = vmatpush.bf16.msra.mxu0 %v183
    %193 = vmatpush.bf16.msra.mxu0 %v182
    %194 = vmatpush.bf16.msra.mxu0 %v181
    %195 = vmatpush.bf16.msra.mxu0 %v180
    %196 = vmatpush.bf16.msra.mxu0 %v179
    %197 = vmatpush.bf16.msra.mxu0 %v178
    %198 = vmatpush.bf16.msra.mxu0 %v177
    %199 = vmatpush.bf16.msra.mxu0 %v176
    %200 = vmatmul.bf16.gmra.mxu0 %v127
    %v201 = vpop.f32.mrf.mxu0
    %v202 = vadd.f32 0.0, %v201
    %v203 = vpop.f32.mrf.mxu0
    %204 = vdwg.mxu0
    %v205 = vadd.f32 %v126, %v202
    %206 = vst [vmem:[#allocation2] sm:$0xf] %v205
    // Predicated region
    $region30: #{roberta_multi_head_classification.1} parent=1 // pred_check
      %p207 = pneg %p37
    $region31: #{roberta_multi_head_classification.1} parent=1 // pred_check_branch
      %209 = sbr.rel (%p207) target = $region33
    $region32: #{roberta_multi_head_classification.1} parent=1 // pred_region
      %v210 = vld [vmem:[#allocation2] sm:$0xf]
      %v211 = vld [vmem:[%s4] sm:$0x1]
      %v213 = vperm.slane %v211, 0
      %v215 = vadd.f32 %v210, %v213
      %216 = vst [vmem:[#allocation6] sm:$0xf] %v215
    $region33: #{roberta_multi_head_classification.1} parent=1 // pred_fallthru
      _
    // Predicated region
    $region34: #{roberta_multi_head_classification.1} parent=1 // pred_check
      _
    $region35: #{roberta_multi_head_classification.1} parent=1 // pred_check_branch
      %218 = sbr.rel (0) target = $region37
    $region36: #{roberta_multi_head_classification.1} parent=1 // pred_region
      %220 = vsyncadd [#allocation5], 0
      %s222 = sshll.u32 [#allocation6], 4
      %s223 = int_to_ptr.vmem [resolvable:$true] %s222
      %s224 = sshll.u32 %s5, 4
      %s225 = int_to_ptr.hbm [resolvable:$true] %s224
      %227 = dma.vmem_to_hbm [thread:$0]  %s223, 64, %s225, [#allocation5]
    $region37: #{roberta_multi_head_classification.1} parent=1 // pred_fallthru
      _
    // Predicated region
    $region38: #{roberta_multi_head_classification.1} parent=1 // pred_check
      _
    $region39: #{roberta_multi_head_classification.1} parent=1 // pred_check_branch
      %229 = sbr.rel (0) target = $region41
    $region40: #{roberta_multi_head_classification.1} parent=1 // pred_region
      %231 = dma.done [#allocation5], 64
    $region41: #{roberta_multi_head_classification.1} parent=1 // pred_fallthru
      _
    %232 = vsyncpa [#allocation4], 1
    %233 = vsyncpa [#allocation5], 1

</llo_original>
